<compile_context>
chip_gen: v6e
topology: v6e:2x2x1
jax: 0.10.0
libtpu: 0.0.40
codegen_flags: <defaults>
</compile_context>

<pallas_src>
import jax
import jax.numpy as jnp
from jax.experimental import pallas as pl
from jax.experimental.pallas import tpu as pltpu

BN_EPS = 1e-5


def projection_kernel(x_ref, w1_ref, bn_ref, w2_ref, b2_ref, out_ref, h_ref):
    # ---- dense1 + folded BatchNorm (training-mode batch stats) + ReLU --------
    # Computed once per outer ("core") index; cached in VMEM scratch (bf16) and
    # reused for every dense2 tile along the inner grid axis.
    @pl.when(pl.program_id(1) == 0)
    def _():
        xb = x_ref[...].astype(jnp.bfloat16)
        h = jnp.dot(xb, w1_ref[...], preferred_element_type=jnp.float32)
        mean = jnp.mean(h, axis=0, keepdims=True)
        var = jnp.maximum(jnp.mean(h * h, axis=0, keepdims=True) - mean * mean, 0.0)
        scale = bn_ref[0:1, :] * jax.lax.rsqrt(var + BN_EPS)     # gamma row
        shift = bn_ref[1:2, :] - mean * scale                    # beta row
        h_ref[...] = jnp.maximum(h * scale + shift, 0.0).astype(jnp.bfloat16)

    # ---- dense2 tile: (B, H) @ (H, tn) + b2, f32 accumulation ---------------
    out_ref[...] = (jnp.dot(h_ref[...], w2_ref[...],
                            preferred_element_type=jnp.float32)
                    + b2_ref[...]).astype(out_ref.dtype)


def _round_up(x, m):
    return (x + m - 1) // m * m


def projection_forward(inputs, params, *, tn=None):
    """Forward pass of Projection (normalizer='batch', training-mode statistics).

    inputs: (B, ...) float32, flattened to (B, dim_input). Returns (B, output_dim) f32.
    """
    x = inputs.reshape(inputs.shape[0], -1)          # f32; cast to bf16 inside kernel
    B, din = x.shape
    H = params["w1"].shape[1]
    dout = params["w2"].shape[1]
    assert B >= 2, "training-mode BatchNorm1d needs batch >= 2 (matches PyTorch)"

    # ---- generation-aware VMEM budget (v7x: 64 MiB per TensorCore) ----------
    vmem_cap = 64 << 20                              # conservative fallback
    try:
        vmem_cap = int(pltpu.get_tpu_info().vmem_capacity_bytes)
    except Exception:
        pass
    vmem_budget = vmem_cap * 3 // 4                  # ~25% headroom

    # ---- lane-dense dense2 tile width derived from the VMEM budget ----------
    # Resident (single-buffered) operands + cached h scratch + f32 temps margin.
    fixed_bytes = (B * din * 4 + din * H * 2 + 2 * H * 4   # x, w1, gamma/beta
                   + B * H * 2                              # cached h (bf16 scratch)
                   + 6 * B * H * 4)                         # f32 temporaries margin
    if tn is None:
        tn = 1024 if H <= 2048 else 512              # few, large lane-dense steps
    tn = max(128, min(_round_up(tn, 128), _round_up(dout, 128)))
    while tn > 128:
        per_tile = 2 * (H * tn * 2 + tn * 4 + B * tn * 4)   # double-buffered w2/b2/out
        if fixed_bytes + per_tile <= vmem_budget // 2:
            break
        tn -= 128
    per_tile = 2 * (H * tn * 2 + tn * 4 + B * tn * 4)
    vmem_limit = int(min(vmem_budget, max(32 << 20, fixed_bytes + per_tile + (4 << 20))))

    n_tiles = pl.cdiv(dout, tn)
    # Outer "parallel" axis (megacore sharding on v7x) x inner "arbitrary" tile axis.
    n_outer = 2 if (n_tiles >= 2 and n_tiles % 2 == 0) else 1
    n_inner = n_tiles // n_outer

    w1 = params["w1"].astype(jnp.bfloat16)
    w2 = params["w2"].astype(jnp.bfloat16)
    bn = jnp.concatenate([params["gamma"], params["beta"]], axis=0)  # (2, H) f32
    b2 = params["b2"]                                                # (1, dout) f32
    # dense1 bias intentionally absent: exactly cancelled by batch-stat BatchNorm.

    flops = n_outer * 2 * B * din * H + 2 * B * H * dout
    bytes_accessed = (B * din * 4 + din * H * 2 + 2 * H * 4
                      + H * dout * 2 + dout * 4 + B * dout * 4)

    out = pl.pallas_call(
        projection_kernel,
        out_shape=jax.ShapeDtypeStruct((B, dout), jnp.float32),
        grid_spec=pltpu.PrefetchScalarGridSpec(
            num_scalar_prefetch=0,
            grid=(n_outer, n_inner),
            in_specs=[
                # Grid-invariant operands: single-buffered (no wasted second copy).
                pl.BlockSpec((B, din), lambda c, t: (0, 0),
                             pipeline_mode=pl.Buffered(1)),               # x   (f32)
                pl.BlockSpec((din, H), lambda c, t: (0, 0),
                             pipeline_mode=pl.Buffered(1)),               # w1  (bf16)
                pl.BlockSpec((2, H), lambda c, t: (0, 0),
                             pipeline_mode=pl.Buffered(1)),               # gamma/beta
                # Streamed dense2 operands: default double-buffering (DMA overlap).
                pl.BlockSpec((H, tn), lambda c, t: (0, c * n_inner + t)),  # w2 tile
                pl.BlockSpec((1, tn), lambda c, t: (0, c * n_inner + t)),  # b2 tile
            ],
            out_specs=pl.BlockSpec((B, tn), lambda c, t: (0, c * n_inner + t)),
            scratch_shapes=[pltpu.VMEM((B, H), jnp.bfloat16)],             # cached h
        ),
        compiler_params=pltpu.CompilerParams(
            dimension_semantics=("parallel", "arbitrary"),
            vmem_limit_bytes=vmem_limit),
        cost_estimate=pl.CostEstimate(flops=flops,
                                      transcendentals=n_outer * H,
                                      bytes_accessed=bytes_accessed),
    )(x, w1, bn, w2, b2)
    return out


def init_params(key, end, dim_state, output_dim):
    """PyTorch-default init: Linear uniform +/- 1/sqrt(fan_in); BatchNorm1d gamma=1, beta=0.
    Weights stored (in, out), kept in bf16 to halve HBM traffic. dense1's bias is
    omitted: training-mode BatchNorm cancels it exactly (shift-invariance)."""
    din = (end - 30) * dim_state
    hidden = output_dim * 2
    k1, k2, k3 = jax.random.split(key, 3)

    bound1 = 1.0 / (din ** 0.5)
    w1 = jax.random.uniform(k1, (din, hidden), jnp.float32, -bound1, bound1)
    bound2 = 1.0 / (hidden ** 0.5)
    w2 = jax.random.uniform(k2, (hidden, output_dim), jnp.float32, -bound2, bound2)
    b2 = jax.random.uniform(k3, (1, output_dim), jnp.float32, -bound2, bound2)
    return {
        "w1": w1.astype(jnp.bfloat16),
        "gamma": jnp.ones((1, hidden), jnp.float32),
        "beta": jnp.zeros((1, hidden), jnp.float32),
        "w2": w2.astype(jnp.bfloat16),
        "b2": b2,
    }


def projection_reference(x_flat, p):
    """Pure-JAX reference matching the kernel numerics (bf16-rounded matmul inputs,
    f32 accumulation, training-mode BatchNorm with biased variance, no dense1 bias)."""
    xb = x_flat.astype(jnp.bfloat16).astype(jnp.float32)
    h = xb @ p["w1"].astype(jnp.float32)
    mean = jnp.mean(h, axis=0, keepdims=True)
    var = jnp.maximum(jnp.mean(h * h, axis=0, keepdims=True) - mean * mean, 0.0)
    scale = p["gamma"] * jax.lax.rsqrt(var + BN_EPS)
    shift = p["beta"] - mean * scale
    h = jnp.maximum(h * scale + shift, 0.0)
    hb = h.astype(jnp.bfloat16).astype(jnp.float32)
    return hb @ p["w2"].astype(jnp.float32) + p["b2"]


if __name__ == "__main__":
    key = jax.random.PRNGKey(0)

    # Case 1: module defaults — dim_input=(38-30)*4=32, hidden=512, output_dim=256.
    end, dim_state, output_dim, batch = 38, 4, 256, 16
    kx, kp = jax.random.split(key)
    inputs = jax.random.normal(kx, (batch, end - 30, dim_state), jnp.float32)
    params = init_params(kp, end, dim_state, output_dim)

    out = projection_forward(inputs, params)
    jax.block_until_ready(out)
    ref = projection_reference(inputs.reshape(batch, -1), params)
    assert out.shape == (batch, output_dim)
    assert jnp.allclose(out, ref, atol=2e-2, rtol=2e-2)

    # Case 2: forced tn=128 -> grid (2, 1): exercises the parallel outer axis
    # (megacore sharding) with streamed, double-buffered w2 tiles.
    out2 = projection_forward(inputs, params, tn=128)
    jax.block_until_ready(out2)
    assert jnp.allclose(out2, ref, atol=2e-2, rtol=2e-2)

    # Case 3: output_dim=320 (not a multiple of tn), tn=128 -> grid (1, 3):
    # exercises reuse of the cached dense1+BN activations across inner tiles and
    # the masked partial final output block (no wrapper-side padding or slicing).
    output_dim3 = 320
    kx3, kp3 = jax.random.split(jax.random.PRNGKey(1))
    inputs3 = jax.random.normal(kx3, (batch, end - 30, dim_state), jnp.float32)
    params3 = init_params(kp3, end, dim_state, output_dim3)
    out3 = projection_forward(inputs3, params3, tn=128)
    jax.block_until_ready(out3)
    ref3 = projection_reference(inputs3.reshape(batch, -1), params3)
    assert out3.shape == (batch, output_dim3)
    assert jnp.allclose(out3, ref3, atol=2e-2, rtol=2e-2)

    print("KERNEL_OK")
</pallas_src>

<mosaic_0001>
module attributes {stable_mosaic.version = 11 : i64} {
  func.func @projection_kernel(%arg0: i32, %arg1: i32, %arg2: memref<16x32xf32, #tpu.memory_space<vmem>>, %arg3: memref<32x512xbf16, #tpu.memory_space<vmem>>, %arg4: memref<2x512xf32, #tpu.memory_space<vmem>>, %arg5: memref<512x256xbf16, #tpu.memory_space<vmem>>, %arg6: memref<1x256xf32, #tpu.memory_space<vmem>>, %arg7: memref<16x256xf32, #tpu.memory_space<vmem>>, %arg8: memref<16x512xbf16, #tpu.memory_space<vmem>>) attributes {dimension_semantics = [#tpu.dimension_semantics<parallel>, #tpu.dimension_semantics<arbitrary>], iteration_bounds = array<i64: 1, 1>, scalar_prefetch = 0 : i64, scratch_operands = 1 : i64, tpu.core_type = #tpu.core_type<tc>, window_params = [{pipeline_mode = #tpu.pipeline_mode<synchronous>, transform_indices = @transform_0, window_bounds = array<i64: 16, 32>}, {pipeline_mode = #tpu.pipeline_mode<synchronous>, transform_indices = @transform_1, window_bounds = array<i64: 32, 512>}, {pipeline_mode = #tpu.pipeline_mode<synchronous>, transform_indices = @transform_2, window_bounds = array<i64: 2, 512>}, {transform_indices = @transform_3, window_bounds = array<i64: 512, 256>}, {transform_indices = @transform_4, window_bounds = array<i64: 1, 256>}, {transform_indices = @transform_5, window_bounds = array<i64: 16, 256>}]} {
    %c0_i32 = arith.constant 0 : i32
    %0 = arith.cmpi eq, %arg1, %c0_i32 : i32
    %1 = arith.extui %0 : i1 to i32
    %c0_i32_0 = arith.constant 0 : i32
    %2 = arith.cmpi ne, %1, %c0_i32_0 : i32
    scf.if %2 {
      %c0_8 = arith.constant 0 : index
      %c0_9 = arith.constant 0 : index
      %10 = vector.load %arg2[%c0_8, %c0_9] : memref<16x32xf32, #tpu.memory_space<vmem>>, vector<16x32xf32>
      %11 = arith.truncf %10 : vector<16x32xf32> to vector<16x32xbf16>
      %c0_10 = arith.constant 0 : index
      %c0_11 = arith.constant 0 : index
      %12 = vector.load %arg3[%c0_10, %c0_11] : memref<32x512xbf16, #tpu.memory_space<vmem>>, vector<32x512xbf16>
      %cst_12 = arith.constant dense<0.000000e+00> : vector<16x512xf32>
      %13 = tpu.matmul %11, %12, %cst_12 {dimension_numbers = #tpu.dot_dimension_numbers<[1], [0], [0], [1], [0, 0, 1, 1], [], []>} : vector<16x32xbf16>, vector<32x512xbf16>, vector<16x512xf32> -> vector<16x512xf32>
      %cst_13 = arith.constant dense<0.000000e+00> : vector<512xf32>
      %14 = vector.multi_reduction <add>, %13, %cst_13 [0] : vector<16x512xf32> to vector<512xf32>
      %15 = vector.shape_cast %14 : vector<512xf32> to vector<1x512xf32>
      %cst_14 = arith.constant 1.600000e+01 : f32
      %16 = vector.broadcast %cst_14 : f32 to vector<1x512xf32>
      %17 = arith.divf %15, %16 : vector<1x512xf32>
      %18 = arith.mulf %13, %13 : vector<16x512xf32>
      %cst_15 = arith.constant dense<0.000000e+00> : vector<512xf32>
      %19 = vector.multi_reduction <add>, %18, %cst_15 [0] : vector<16x512xf32> to vector<512xf32>
      %20 = vector.shape_cast %19 : vector<512xf32> to vector<1x512xf32>
      %cst_16 = arith.constant 1.600000e+01 : f32
      %21 = vector.broadcast %cst_16 : f32 to vector<1x512xf32>
      %22 = arith.divf %20, %21 : vector<1x512xf32>
      %23 = arith.mulf %17, %17 : vector<1x512xf32>
      %24 = arith.subf %22, %23 : vector<1x512xf32>
      %cst_17 = arith.constant 0.000000e+00 : f32
      %25 = vector.broadcast %cst_17 : f32 to vector<1x512xf32>
      %26 = arith.maximumf %24, %25 : vector<1x512xf32>
      %c0_18 = arith.constant 0 : index
      %c0_19 = arith.constant 0 : index
      %27 = vector.load %arg4[%c0_18, %c0_19] : memref<2x512xf32, #tpu.memory_space<vmem>>, vector<1x512xf32>
      %cst_20 = arith.constant 9.99999974E-6 : f32
      %28 = vector.broadcast %cst_20 : f32 to vector<1x512xf32>
      %29 = arith.addf %26, %28 : vector<1x512xf32>
      %30 = math.rsqrt %29 : vector<1x512xf32>
      %31 = arith.mulf %27, %30 : vector<1x512xf32>
      %c1 = arith.constant 1 : index
      %c0_21 = arith.constant 0 : index
      %32 = vector.load %arg4[%c1, %c0_21] : memref<2x512xf32, #tpu.memory_space<vmem>>, vector<1x512xf32>
      %33 = arith.mulf %17, %31 : vector<1x512xf32>
      %34 = arith.subf %32, %33 : vector<1x512xf32>
      %35 = vector.broadcast %31 : vector<1x512xf32> to vector<16x512xf32>
      %36 = arith.mulf %13, %35 : vector<16x512xf32>
      %37 = vector.broadcast %34 : vector<1x512xf32> to vector<16x512xf32>
      %38 = arith.addf %36, %37 : vector<16x512xf32>
      %cst_22 = arith.constant 0.000000e+00 : f32
      %39 = vector.broadcast %cst_22 : f32 to vector<16x512xf32>
      %40 = arith.maximumf %38, %39 : vector<16x512xf32>
      %41 = arith.truncf %40 : vector<16x512xf32> to vector<16x512xbf16>
      %c0_23 = arith.constant 0 : index
      %c0_24 = arith.constant 0 : index
      %42 = vector.load %arg8[%c0_23, %c0_24] : memref<16x512xbf16, #tpu.memory_space<vmem>>, vector<16x512xbf16>
      tpu.vector_store %arg8[%c0_23, %c0_24], %41 {strides = array<i32>} : memref<16x512xbf16, #tpu.memory_space<vmem>>, vector<16x512xbf16>,
    } else {
    }
    %c0 = arith.constant 0 : index
    %c0_1 = arith.constant 0 : index
    %3 = vector.load %arg8[%c0, %c0_1] : memref<16x512xbf16, #tpu.memory_space<vmem>>, vector<16x512xbf16>
    %c0_2 = arith.constant 0 : index
    %c0_3 = arith.constant 0 : index
    %4 = vector.load %arg5[%c0_2, %c0_3] : memref<512x256xbf16, #tpu.memory_space<vmem>>, vector<512x256xbf16>
    %cst = arith.constant dense<0.000000e+00> : vector<16x256xf32>
    %5 = tpu.matmul %3, %4, %cst {dimension_numbers = #tpu.dot_dimension_numbers<[1], [0], [0], [1], [0, 0, 1, 1], [], []>} : vector<16x512xbf16>, vector<512x256xbf16>, vector<16x256xf32> -> vector<16x256xf32>
    %c0_4 = arith.constant 0 : index
    %c0_5 = arith.constant 0 : index
    %6 = vector.load %arg6[%c0_4, %c0_5] : memref<1x256xf32, #tpu.memory_space<vmem>>, vector<1x256xf32>
    %7 = vector.broadcast %6 : vector<1x256xf32> to vector<16x256xf32>
    %8 = arith.addf %5, %7 : vector<16x256xf32>
    %c0_6 = arith.constant 0 : index
    %c0_7 = arith.constant 0 : index
    %9 = vector.load %arg7[%c0_6, %c0_7] : memref<16x256xf32, #tpu.memory_space<vmem>>, vector<16x256xf32>
    tpu.vector_store %arg7[%c0_6, %c0_7], %8 {strides = array<i32>} : memref<16x256xf32, #tpu.memory_space<vmem>>, vector<16x256xf32>,
    return
  }
  func.func @transform_0(%arg0: i32, %arg1: i32) -> (i32, i32) {
    %c0_i32 = arith.constant 0 : i32
    %c0_i32_0 = arith.constant 0 : i32
    %c0_i32_1 = arith.constant 0 : i32
    return %c0_i32, %c0_i32_0 : i32, i32
  }
  func.func @transform_1(%arg0: i32, %arg1: i32) -> (i32, i32) {
    %c0_i32 = arith.constant 0 : i32
    %c0_i32_0 = arith.constant 0 : i32
    %c0_i32_1 = arith.constant 0 : i32
    return %c0_i32, %c0_i32_0 : i32, i32
  }
  func.func @transform_2(%arg0: i32, %arg1: i32) -> (i32, i32) {
    %c0_i32 = arith.constant 0 : i32
    %c0_i32_0 = arith.constant 0 : i32
    %c0_i32_1 = arith.constant 0 : i32
    return %c0_i32, %c0_i32_0 : i32, i32
  }
  func.func @transform_3(%arg0: i32, %arg1: i32) -> (i32, i32) {
    %c1_i32 = arith.constant 1 : i32
    %0 = arith.muli %arg0, %c1_i32 : i32
    %1 = arith.addi %0, %arg1 : i32
    %c0_i32 = arith.constant 0 : i32
    %c0_i32_0 = arith.constant 0 : i32
    return %c0_i32, %1 : i32, i32
  }
  func.func @transform_4(%arg0: i32, %arg1: i32) -> (i32, i32) {
    %c1_i32 = arith.constant 1 : i32
    %0 = arith.muli %arg0, %c1_i32 : i32
    %1 = arith.addi %0, %arg1 : i32
    %c0_i32 = arith.constant 0 : i32
    %c0_i32_0 = arith.constant 0 : i32
    return %c0_i32, %1 : i32, i32
  }
  func.func @transform_5(%arg0: i32, %arg1: i32) -> (i32, i32) {
    %c1_i32 = arith.constant 1 : i32
    %0 = arith.muli %arg0, %c1_i32 : i32
    %1 = arith.addi %0, %arg1 : i32
    %c0_i32 = arith.constant 0 : i32
    %c0_i32_0 = arith.constant 0 : i32
    return %c0_i32, %1 : i32, i32
  }
}

</mosaic_0001>

<llo_original>
// kernel: tpu_custom_call.1
$region0: #{tpu_custom_call.1}
  #allocation0 [shape = 'u32[]', space=smem, size = 0x4, offset = 0x4, fixed_abs, tag = 'smem constant byte address 0x4 - core index']
  #allocation1 [shape = 'u32[144,128]{1,0:T(1,128)}', space=vmem, size = 0x12000, scoped, tag = 'internal scratch']
  #allocation2 [shape = 'bf16[16,512]{1,0:T(8,128)(2,1)}', space=vmem, size = 0x4000, scoped, tag = 'scratch operand']
  %s0 = inlined_call_operand.hbm [shape: f32[16,32], index: 0, kind: input, shape index: {}]
  %s1 = inlined_call_operand.hbm [shape: bf16[32,512], index: 1, kind: input, shape index: {}]
  %s2 = inlined_call_operand.hbm [shape: f32[2,512], index: 2, kind: input, shape index: {}]
  %s3 = inlined_call_operand.hbm [shape: bf16[512,256], index: 3, kind: input, shape index: {}]
  %s4 = inlined_call_operand.vmem [shape: f32[1,256], index: 4, kind: input, shape index: {}]
  %s5 = inlined_call_operand.hbm [shape: f32[16,256], index: 5, kind: output, shape index: {}]
  %s6 = sld [smem:[#allocation0]]
  $region50: #{tpu_custom_call.1} parent=0
    _
  %s8 = ssub.s32 1, %s6
  %s9 = scalar_select 0, %s8, %s6
  $region1: #{tpu_custom_call.1} parent=0
    #allocation3 [shape = 'u8[8192]{0}', space=vmem, size = 0x2000, scoped, tag = 'input window, operand 0, single buffered']
    #allocation4 [shape = 's32[1]{0}', space=sflag, size = 0x4, scoped, tag = 'scoped memory for tpu_custom_call.1']
    #allocation5 [shape = 's32[1]{0}', space=sflag, size = 0x4, scoped, tag = 'scoped memory for tpu_custom_call.1']
    #allocation6 [shape = 'u8[32768]{0}', space=vmem, size = 0x8000, scoped, tag = 'input window, operand 1, single buffered']
    #allocation7 [shape = 's32[1]{0}', space=sflag, size = 0x4, scoped, tag = 'scoped memory for tpu_custom_call.1']
    #allocation8 [shape = 'u8[4096]{0}', space=vmem, size = 0x1000, scoped, tag = 'input window, operand 2, single buffered']
    #allocation9 [shape = 'u8[262144]{0}', space=vmem, size = 0x40000, scoped, tag = 'input window, operand 3, single buffered']
    #allocation10 [shape = 's32[1]{0}', space=sflag, size = 0x4, scoped, tag = 'scoped memory for tpu_custom_call.1']
    #allocation11 [shape = 'u8[16384]{0}', space=vmem, size = 0x4000, scoped, tag = 'output window, operand 0, single buffered']
    %10 = vsyncpa [#allocation4], 0
    %11 = vsyncpa [#allocation7], 0
    %12 = vsyncpa [#allocation10], 0
    %13 = vsyncpa [#allocation5], 0
    // Predicated region
    $region2: #{tpu_custom_call.1} parent=1 // pred_check
      _
    $region3: #{tpu_custom_call.1} parent=1 // pred_check_branch
      %15 = sbr.rel (0) target = $region5
    $region4: #{tpu_custom_call.1} parent=1 // pred_region
      %s17 = ssub.s32 256, 256
      %18 = vsyncadd [#allocation4], %s17
      %s19 = sshll.u32 [#allocation3], 4
      %s20 = int_to_ptr.vmem [resolvable:$true] %s19
      %25 = dma.hbm_to_vmem [thread:$0]  %s0, 256, %s20, [#allocation4], 128, 128, 8
    $region5: #{tpu_custom_call.1} parent=1 // pred_fallthru
      _
    // Predicated region
    $region6: #{tpu_custom_call.1} parent=1 // pred_check
      _
    $region7: #{tpu_custom_call.1} parent=1 // pred_check_branch
      %27 = sbr.rel (0) target = $region9
    $region8: #{tpu_custom_call.1} parent=1 // pred_region
      %s29 = ssub.s32 1024, 1024
      %30 = vsyncadd [#allocation7], %s29
      %s31 = sshll.u32 [#allocation6], 4
      %s32 = int_to_ptr.vmem [resolvable:$true] %s31
      %37 = dma.hbm_to_vmem [thread:$0]  %s1, 1024, %s32, [#allocation7], 256, 256, 16
    $region9: #{tpu_custom_call.1} parent=1 // pred_fallthru
      _
    // Predicated region
    $region10: #{tpu_custom_call.1} parent=1 // pred_check
      _
    $region11: #{tpu_custom_call.1} parent=1 // pred_check_branch
      %39 = sbr.rel (0) target = $region13
    $region12: #{tpu_custom_call.1} parent=1 // pred_region
      %s41 = ssub.s32 128, 128
      %42 = vsyncadd [#allocation7], %s41
      %s44 = sshll.u32 [#allocation8], 4
      %s45 = int_to_ptr.vmem [resolvable:$true] %s44
      %47 = dma.hbm_to_vmem [thread:$0]  %s2, 128, %s45, [#allocation7]
    $region13: #{tpu_custom_call.1} parent=1 // pred_fallthru
      _
    // Predicated region
    $region14: #{tpu_custom_call.1} parent=1 // pred_check
      _
    $region15: #{tpu_custom_call.1} parent=1 // pred_check_branch
      %49 = sbr.rel (0) target = $region17
    $region16: #{tpu_custom_call.1} parent=1 // pred_region
      %s50 = sadd.s32 0, 0
      %s51 = smul.u32 2, %s50
      %s53 = ssub.s32 8192, 8192
      %54 = vsyncadd [#allocation10], %s53
      %s55 = smul.addr %s51, 64
      %s56 = scalar_lea.hbm %s3, %s55
      %s57 = sshll.u32 [#allocation9], 4
      %s58 = int_to_ptr.vmem [resolvable:$true] %s57
      %63 = dma.hbm_to_vmem [thread:$0]  %s56, 8192, %s58, [#allocation10], 128, 128, 8
    $region17: #{tpu_custom_call.1} parent=1 // pred_fallthru
      _
    // Predicated region
    $region18: #{tpu_custom_call.1} parent=1 // pred_check
      _
    $region19: #{tpu_custom_call.1} parent=1 // pred_check_branch
      %65 = sbr.rel (0) target = $region21
    $region20: #{tpu_custom_call.1} parent=1 // pred_region
      %s66 = sadd.s32 0, 0
      %s67 = smul.u32 2, %s66
      %p68 = scmp.lt.s32.totalorder %s67, 1
      %s69 = scalar_select %p68, %s67, 1
      %s70 = scalar_lea.vmem %s4, %s69
      %s71 = sadd.s32 0, 0
      %s72 = smul.u32 2, %s71
    $region21: #{tpu_custom_call.1} parent=1 // pred_fallthru
      _
    // Predicated region
    $region22: #{tpu_custom_call.1} parent=1 // pred_check
      _
    $region23: #{tpu_custom_call.1} parent=1 // pred_check_branch
      %74 = sbr.rel (0) target = $region25
    $region24: #{tpu_custom_call.1} parent=1 // pred_region
      %75 = dma.done [#allocation4], 256
    $region25: #{tpu_custom_call.1} parent=1 // pred_fallthru
      _
    // Predicated region
    $region26: #{tpu_custom_call.1} parent=1 // pred_check
      _
    $region27: #{tpu_custom_call.1} parent=1 // pred_check_branch
      %77 = sbr.rel (0) target = $region29
    $region28: #{tpu_custom_call.1} parent=1 // pred_region
      %78 = dma.done [#allocation7], 1024
    $region29: #{tpu_custom_call.1} parent=1 // pred_fallthru
      _
    // Predicated region
    $region30: #{tpu_custom_call.1} parent=1 // pred_check
      _
    $region31: #{tpu_custom_call.1} parent=1 // pred_check_branch
      %80 = sbr.rel (0) target = $region33
    $region32: #{tpu_custom_call.1} parent=1 // pred_region
      %81 = dma.done [#allocation7], 128
    $region33: #{tpu_custom_call.1} parent=1 // pred_fallthru
      _
    // Predicated region
    $region34: #{tpu_custom_call.1} parent=1 // pred_check
      _
    $region35: #{tpu_custom_call.1} parent=1 // pred_check_branch
      %83 = sbr.rel (0) target = $region37
    $region36: #{tpu_custom_call.1} parent=1 // pred_region
      %84 = dma.done [#allocation10], 8192
    $region37: #{tpu_custom_call.1} parent=1 // pred_fallthru
      _
    %s85 = sadd.s32 0, 0
    %s86 = smul.u32 2, %s85
    %p87 = scmp.lt.s32.totalorder %s86, 1
    %s88 = scalar_select %p87, %s86, 1
    %s89 = scalar_lea.vmem %s4, %s88
    %s90 = sadd.s32 0, 0
    %s91 = smul.u32 2, %s90
    %s92 = sadd.s32 0, 0
    %s93 = smul.u32 2, %s92
    %p94 = scmp.lt.s32.totalorder %s93, 1
    %s95 = scalar_select %p94, %s93, 1
    %s96 = scalar_lea.vmem %s4, %s95
    %s97 = sadd.s32 0, 0
    %s98 = smul.u32 2, %s97
    %s99 = sadd.s32 0, 0
    %s100 = smul.u32 2, %s99
    %p102 = scmp.eq.s32.totalorder 0, 0
    // Predicated region
    $region38: #{tpu_custom_call.1} parent=1 // pred_check
      %p103 = pneg %p102
    $region39: #{tpu_custom_call.1} parent=1 // pred_check_branch
      %105 = sbr.rel (%p103) target = $region41
    $region40: #{tpu_custom_call.1} parent=1 // pred_region
      %v106 = vld [vmem:[#allocation3] sm:$0xff]
      %v107 = vld [vmem:[#allocation3 + $0x8] sm:$0xff]
      %v108 = vpack.c.bf16 %v107, %v106
      %v109 = vld [vmem:[#allocation6] sm:$0xff]
      %v110 = vld [vmem:[#allocation6 + $0x8] sm:$0xff]
      %v111 = vld [vmem:[#allocation6 + $0x10] sm:$0xff]
      %v112 = vld [vmem:[#allocation6 + $0x18] sm:$0xff]
      %v113 = vld [vmem:[#allocation6 + $0x20] sm:$0xff]
      %v114 = vld [vmem:[#allocation6 + $0x28] sm:$0xff]
      %v115 = vld [vmem:[#allocation6 + $0x30] sm:$0xff]
      %v116 = vld [vmem:[#allocation6 + $0x38] sm:$0xff]
      %v125 = vunpack.c.l.b16 %v109
      %v126 = vunpack.c.h.b16 %v109
      %v127 = vunpack.c.l.b16 %v110
      %v128 = vunpack.c.h.b16 %v110
      %v129 = vunpack.c.l.b16 %v111
      %v130 = vunpack.c.h.b16 %v111
      %v131 = vunpack.c.l.b16 %v112
      %v132 = vunpack.c.h.b16 %v112
      %v133 = vunpack.c.l.b16 %v113
      %v134 = vunpack.c.h.b16 %v113
      %v135 = vunpack.c.l.b16 %v114
      %v136 = vunpack.c.h.b16 %v114
      %v137 = vunpack.c.l.b16 %v115
      %v138 = vunpack.c.h.b16 %v115
      %v139 = vunpack.c.l.b16 %v116
      %v140 = vunpack.c.h.b16 %v116
      %v141 = vpack.c.b16 %v129, %v125
      %v142 = vpack.c.b16 %v130, %v126
      %v143 = vpack.c.b16 %v131, %v127
      %v144 = vpack.c.b16 %v132, %v128
      %v145 = vpack.c.b16 %v137, %v133
      %v146 = vpack.c.b16 %v138, %v134
      %v147 = vpack.c.b16 %v139, %v135
      %v148 = vpack.c.b16 %v140, %v136
      %vm157 = vcmask 261120
      %v159 = vsel %vm157, %v108, 0
      %161 = vmatprep.subr.bf16.mxu0 0
      %162 = vmatpush1.bf16.msra.mxu0 0
      %163 = vmatprep.subr.bf16.mxu0 0
      %164 = vmatpush1.bf16.msra.mxu0 0
      %165 = vmatprep.subr.bf16.mxu0 0
      %166 = vmatpush1.bf16.msra.mxu0 0
      %167 = vmatprep.subr.bf16.mxu0 0
      %168 = vmatpush1.bf16.msra.mxu0 0
      %169 = vmatprep.subr.bf16.mxu0 0
      %170 = vmatpush1.bf16.msra.mxu0 0
      %171 = vmatprep.subr.bf16.mxu0 0
      %172 = vmatpush1.bf16.msra.mxu0 0
      %173 = vmatprep.subr.bf16.mxu0 %v146
      %174 = vmatpush1.bf16.msra.mxu0 %v145
      %175 = vmatprep.subr.bf16.mxu0 %v142
      %176 = vmatpush1.bf16.msra.mxu0 %v141
      %177 = vmatprep.subr.bf16.mxu0 0
      %178 = vmatpush2.bf16.msra.mxu0 0
      %179 = vmatprep.subr.bf16.mxu0 0
      %180 = vmatpush2.bf16.msra.mxu0 0
      %181 = vmatprep.subr.bf16.mxu0 0
      %182 = vmatpush2.bf16.msra.mxu0 0
      %183 = vmatprep.subr.bf16.mxu0 0
      %184 = vmatpush2.bf16.msra.mxu0 0
      %185 = vmatprep.subr.bf16.mxu0 0
      %186 = vmatpush2.bf16.msra.mxu0 0
      %187 = vmatprep.subr.bf16.mxu0 0
      %188 = vmatpush2.bf16.msra.mxu0 0
      %189 = vmatprep.subr.bf16.mxu0 0
      %190 = vmatpush2.bf16.msra.mxu0 0
      %191 = vmatprep.subr.bf16.mxu0 0
      %192 = vmatpush2.bf16.msra.mxu0 0
      %193 = vmatprep.mubr.bf16.mxu0 0
      %194 = vmatmul.mubr.bf16.gmra.mxu0 %v159
      %v195 = vpop.f32.mrf.mxu0
      %v196 = vadd.f32 0.0, %v195
      %v197 = vpop.f32.mrf.mxu0
      %v198 = vadd.f32 0.0, %v197
      %v199 = vpop.f32.mrf.mxu0
      %v200 = vadd.f32 0.0, %v199
      %v201 = vpop.f32.mrf.mxu0
      %v202 = vadd.f32 0.0, %v201
      %203 = vdwg.mxu0
      %204 = vmatprep.subr.bf16.mxu0 0
      %205 = vmatpush1.bf16.msra.mxu0 0
      %206 = vmatprep.subr.bf16.mxu0 0
      %207 = vmatpush1.bf16.msra.mxu0 0
      %208 = vmatprep.subr.bf16.mxu0 0
      %209 = vmatpush1.bf16.msra.mxu0 0
      %210 = vmatprep.subr.bf16.mxu0 0
      %211 = vmatpush1.bf16.msra.mxu0 0
      %212 = vmatprep.subr.bf16.mxu0 0
      %213 = vmatpush1.bf16.msra.mxu0 0
      %214 = vmatprep.subr.bf16.mxu0 0
      %215 = vmatpush1.bf16.msra.mxu0 0
      %216 = vmatprep.subr.bf16.mxu0 %v148
      %217 = vmatpush1.bf16.msra.mxu0 %v147
      %218 = vmatprep.subr.bf16.mxu0 %v144
      %219 = vmatpush1.bf16.msra.mxu0 %v143
      %220 = vmatprep.subr.bf16.mxu0 0
      %221 = vmatpush2.bf16.msra.mxu0 0
      %222 = vmatprep.subr.bf16.mxu0 0
      %223 = vmatpush2.bf16.msra.mxu0 0
      %224 = vmatprep.subr.bf16.mxu0 0
      %225 = vmatpush2.bf16.msra.mxu0 0
      %226 = vmatprep.subr.bf16.mxu0 0
      %227 = vmatpush2.bf16.msra.mxu0 0
      %228 = vmatprep.subr.bf16.mxu0 0
      %229 = vmatpush2.bf16.msra.mxu0 0
      %230 = vmatprep.subr.bf16.mxu0 0
      %231 = vmatpush2.bf16.msra.mxu0 0
      %232 = vmatprep.subr.bf16.mxu0 0
      %233 = vmatpush2.bf16.msra.mxu0 0
      %234 = vmatprep.subr.bf16.mxu0 0
      %235 = vmatpush2.bf16.msra.mxu0 0
      %236 = vmatprep.mubr.bf16.mxu0 0
      %237 = vmatmul.mubr.bf16.gmra.mxu0 %v159
      %v238 = vpop.f32.mrf.mxu0
      %v239 = vadd.f32 0.0, %v238
      %v240 = vpop.f32.mrf.mxu0
      %v241 = vadd.f32 0.0, %v240
      %v242 = vpop.f32.mrf.mxu0
      %v243 = vadd.f32 0.0, %v242
      %v244 = vpop.f32.mrf.mxu0
      %v245 = vadd.f32 0.0, %v244
      %246 = vdwg.mxu0
      %v247 = vadd.f32 %v196, %v200
      %v248 = vrot.slane %v247, 4
      %v249 = vadd.f32 %v247, %v248
      %v250 = vrot.slane %v249, 2
      %v251 = vadd.f32 %v249, %v250
      %v252 = vrot.slane %v251, 1
      %v253 = vadd.f32 %v251, %v252
      %v254 = vadd.f32 %v198, %v202
      %v255 = vrot.slane %v254, 4
      %v256 = vadd.f32 %v254, %v255
      %v257 = vrot.slane %v256, 2
      %v258 = vadd.f32 %v256, %v257
      %v259 = vrot.slane %v258, 1
      %v260 = vadd.f32 %v258, %v259
      %v261 = vadd.f32 %v239, %v243
      %v262 = vrot.slane %v261, 4
      %v263 = vadd.f32 %v261, %v262
      %v264 = vrot.slane %v263, 2
      %v265 = vadd.f32 %v263, %v264
      %v266 = vrot.slane %v265, 1
      %v267 = vadd.f32 %v265, %v266
      %v268 = vadd.f32 %v241, %v245
      %v269 = vrot.slane %v268, 4
      %v270 = vadd.f32 %v268, %v269
      %v271 = vrot.slane %v270, 2
      %v272 = vadd.f32 %v270, %v271
      %v273 = vrot.slane %v272, 1
      %v274 = vadd.f32 %v272, %v273
      %v275 = vrcp.pop 16.0
      %v276 = vmul.f32 %v253, %v275
      %v277 = vmul.f32 %v260, %v275
      %v278 = vmul.f32 %v267, %v275
      %v279 = vmul.f32 %v274, %v275
      %v280 = vmul.f32 %v196, %v196
      %v281 = vmul.f32 %v198, %v198
      %v282 = vmul.f32 %v239, %v239
      %v283 = vmul.f32 %v241, %v241
      %v284 = vmul.f32 %v200, %v200
      %v285 = vmul.f32 %v202, %v202
      %v286 = vmul.f32 %v243, %v243
      %v287 = vmul.f32 %v245, %v245
      %v288 = vadd.f32 %v280, %v284
      %v289 = vrot.slane %v288, 4
      %v290 = vadd.f32 %v288, %v289
      %v291 = vrot.slane %v290, 2
      %v292 = vadd.f32 %v290, %v291
      %v293 = vrot.slane %v292, 1
      %v294 = vadd.f32 %v292, %v293
      %v295 = vadd.f32 %v281, %v285
      %v296 = vrot.slane %v295, 4
      %v297 = vadd.f32 %v295, %v296
      %v298 = vrot.slane %v297, 2
      %v299 = vadd.f32 %v297, %v298
      %v300 = vrot.slane %v299, 1
      %v301 = vadd.f32 %v299, %v300
      %v302 = vadd.f32 %v282, %v286
      %v303 = vrot.slane %v302, 4
      %v304 = vadd.f32 %v302, %v303
      %v305 = vrot.slane %v304, 2
      %v306 = vadd.f32 %v304, %v305
      %v307 = vrot.slane %v306, 1
      %v308 = vadd.f32 %v306, %v307
      %v309 = vadd.f32 %v283, %v287
      %v310 = vrot.slane %v309, 4
      %v311 = vadd.f32 %v309, %v310
      %v312 = vrot.slane %v311, 2
      %v313 = vadd.f32 %v311, %v312
      %v314 = vrot.slane %v313, 1
      %v315 = vadd.f32 %v313, %v314
      %v316 = vmul.f32 %v294, %v275
      %v317 = vmul.f32 %v301, %v275
      %v318 = vmul.f32 %v308, %v275
      %v319 = vmul.f32 %v315, %v275
      %v320 = vmul.f32 %v276, %v276
      %v321 = vmul.f32 %v277, %v277
      %v322 = vmul.f32 %v278, %v278
      %v323 = vmul.f32 %v279, %v279
      %v324 = vsub.f32 %v316, %v320
      %v325 = vsub.f32 %v317, %v321
      %v326 = vsub.f32 %v318, %v322
      %v327 = vsub.f32 %v319, %v323
      %v328 = vmax.f32 %v324, 0.0
      %v329 = vmax.f32 %v325, 0.0
      %v330 = vmax.f32 %v326, 0.0
      %v331 = vmax.f32 %v327, 0.0
      %v332 = vld [vmem:[#allocation8] ss:$2 sm:$0xf]
      %v333 = vadd.f32 %v328, 1e-05
      %v334 = vadd.f32 %v329, 1e-05
      %v335 = vadd.f32 %v330, 1e-05
      %v336 = vadd.f32 %v331, 1e-05
      %v337 = vrsqrt.pop %v333
      %v338 = vrsqrt.pop %v334
      %v339 = vrsqrt.pop %v335
      %v340 = vrsqrt.pop %v336
      %v345 = vcombine.low %v337, %v338
      %v346 = vcombine.low %v339, %v340
      %v348 = vunpack.c.l.s4 1966171168
      %v349 = vunpack.c.0.s8 %v348
      %v350 = vlaneseq
      %v351 = vshrl.u32 %v350, 7
      %v352 = vsub.s32 %v349, %v351
      %v353 = vrot.slane %v345, %v352
      %v355 = vunpack.c.l.s4 1966171168
      %v356 = vunpack.c.0.s8 %v355
      %v357 = vlaneseq
      %v358 = vshrl.u32 %v357, 7
      %v359 = vsub.s32 %v356, %v358
      %v360 = vrot.slane %v346, %v359
      %v361 = vcombine.low %v353, %v360
      %v363 = vunpack.c.l.s4 1966171168
      %v364 = vunpack.c.0.s8 %v363
      %v365 = vlaneseq
      %v366 = vshrl.u32 %v365, 7
      %v367 = vsub.s32 %v364, %v366
      %v368 = vrot.slane %v361, %v367
      %v370 = vmul.f32 %v332, %v368
      %s371 = scalar_lea.vmem [#allocation8], 1
      %v372 = vld [vmem:[%s371] ss:$2 sm:$0xf]
      %v374 = vlaneseq
      %v375 = vshrl.u32 %v374, 7
      %v376 = vsub.s32 0, %v375
      %v377 = vrot.slane %v370, %v376
      %v378 = vlaneseq
      %v379 = vshrl.u32 %v378, 7
      %v380 = vsub.s32 1, %v379
      %v381 = vrot.slane %v370, %v380
      %v382 = vlaneseq
      %v383 = vshrl.u32 %v382, 7
      %v384 = vsub.s32 2, %v383
      %v385 = vrot.slane %v370, %v384
      %v386 = vlaneseq
      %v387 = vshrl.u32 %v386, 7
      %v388 = vsub.s32 3, %v387
      %v389 = vrot.slane %v370, %v388
      %v394 = vmul.f32 %v276, %v377
      %v395 = vmul.f32 %v277, %v381
      %v396 = vmul.f32 %v278, %v385
      %v397 = vmul.f32 %v279, %v389
      %v402 = vcombine.low %v394, %v395
      %v403 = vcombine.low %v396, %v397
      %v405 = vunpack.c.l.s4 1966171168
      %v406 = vunpack.c.0.s8 %v405
      %v407 = vlaneseq
      %v408 = vshrl.u32 %v407, 7
      %v409 = vsub.s32 %v406, %v408
      %v410 = vrot.slane %v402, %v409
      %v412 = vunpack.c.l.s4 1966171168
      %v413 = vunpack.c.0.s8 %v412
      %v414 = vlaneseq
      %v415 = vshrl.u32 %v414, 7
      %v416 = vsub.s32 %v413, %v415
      %v417 = vrot.slane %v403, %v416
      %v418 = vcombine.low %v410, %v417
      %v420 = vunpack.c.l.s4 1966171168
      %v421 = vunpack.c.0.s8 %v420
      %v422 = vlaneseq
      %v423 = vshrl.u32 %v422, 7
      %v424 = vsub.s32 %v421, %v423
      %v425 = vrot.slane %v418, %v424
      %v427 = vsub.f32 %v372, %v425
      %v428 = vmul.f32 %v196, %v377
      %v429 = vmul.f32 %v198, %v381
      %v430 = vmul.f32 %v239, %v385
      %v431 = vmul.f32 %v241, %v389
      %v432 = vmul.f32 %v200, %v377
      %v433 = vmul.f32 %v202, %v381
      %v434 = vmul.f32 %v243, %v385
      %v435 = vmul.f32 %v245, %v389
      %v437 = vlaneseq
      %v438 = vshrl.u32 %v437, 7
      %v439 = vsub.s32 0, %v438
      %v440 = vrot.slane %v427, %v439
      %v441 = vlaneseq
      %v442 = vshrl.u32 %v441, 7
      %v443 = vsub.s32 1, %v442
      %v444 = vrot.slane %v427, %v443
      %v445 = vlaneseq
      %v446 = vshrl.u32 %v445, 7
      %v447 = vsub.s32 2, %v446
      %v448 = vrot.slane %v427, %v447
      %v449 = vlaneseq
      %v450 = vshrl.u32 %v449, 7
      %v451 = vsub.s32 3, %v450
      %v452 = vrot.slane %v427, %v451
      %v457 = vadd.f32 %v428, %v440
      %v458 = vadd.f32 %v429, %v444
      %v459 = vadd.f32 %v430, %v448
      %v460 = vadd.f32 %v431, %v452
      %v461 = vadd.f32 %v432, %v440
      %v462 = vadd.f32 %v433, %v444
      %v463 = vadd.f32 %v434, %v448
      %v464 = vadd.f32 %v435, %v452
      %v465 = vmax.f32 %v457, 0.0
      %v466 = vmax.f32 %v458, 0.0
      %v467 = vmax.f32 %v459, 0.0
      %v468 = vmax.f32 %v460, 0.0
      %v469 = vmax.f32 %v461, 0.0
      %v470 = vmax.f32 %v462, 0.0
      %v471 = vmax.f32 %v463, 0.0
      %v472 = vmax.f32 %v464, 0.0
      %v473 = vpack.c.bf16 %v469, %v465
      %v474 = vpack.c.bf16 %v470, %v466
      %v475 = vpack.c.bf16 %v471, %v467
      %v476 = vpack.c.bf16 %v472, %v468
      %v481 = vunpack.c.l.b16 %v473
      %v482 = vunpack.c.l.b16 %v474
      %v483 = vunpack.c.l.b16 %v475
      %v484 = vunpack.c.l.b16 %v476
      %v485 = vunpack.c.h.b16 %v473
      %v486 = vunpack.c.h.b16 %v474
      %v487 = vunpack.c.h.b16 %v475
      %v488 = vunpack.c.h.b16 %v476
      %v489 = vpack.c.b16 %v482, %v481
      %v490 = vpack.c.b16 %v484, %v483
      %v491 = vpack.c.b16 %v486, %v485
      %v492 = vpack.c.b16 %v488, %v487
      %497 = vst [vmem:[#allocation2] sm:$0xff] %v489
      %498 = vst [vmem:[#allocation2 + $0x8] sm:$0xff] %v490
      %499 = vst [vmem:[#allocation2 + $0x10] sm:$0xff] %v491
      %500 = vst [vmem:[#allocation2 + $0x18] sm:$0xff] %v492
    $region41: #{tpu_custom_call.1} parent=1 // pred_fallthru
      _
    %v501 = vld [vmem:[#allocation2] sm:$0xff]
    %v502 = vld [vmem:[#allocation2 + $0x8] sm:$0xff]
    %v503 = vld [vmem:[#allocation2 + $0x10] sm:$0xff]
    %v504 = vld [vmem:[#allocation2 + $0x18] sm:$0xff]
    %v505 = vld [vmem:[#allocation9] sm:$0xff]
    %v506 = vld [vmem:[#allocation9 + $0x8] sm:$0xff]
    %v507 = vld [vmem:[#allocation9 + $0x10] sm:$0xff]
    %v508 = vld [vmem:[#allocation9 + $0x18] sm:$0xff]
    %v509 = vld [vmem:[#allocation9 + $0x20] sm:$0xff]
    %v510 = vld [vmem:[#allocation9 + $0x28] sm:$0xff]
    %v511 = vld [vmem:[#allocation9 + $0x30] sm:$0xff]
    %v512 = vld [vmem:[#allocation9 + $0x38] sm:$0xff]
    %v513 = vld [vmem:[#allocation9 + $0x40] sm:$0xff]
    %v514 = vld [vmem:[#allocation9 + $0x48] sm:$0xff]
    %v515 = vld [vmem:[#allocation9 + $0x50] sm:$0xff]
    %v516 = vld [vmem:[#allocation9 + $0x58] sm:$0xff]
    %v517 = vld [vmem:[#allocation9 + $0x60] sm:$0xff]
    %v518 = vld [vmem:[#allocation9 + $0x68] sm:$0xff]
    %v519 = vld [vmem:[#allocation9 + $0x70] sm:$0xff]
    %v520 = vld [vmem:[#allocation9 + $0x78] sm:$0xff]
    %v521 = vld [vmem:[#allocation9 + $0x80] sm:$0xff]
    %v522 = vld [vmem:[#allocation9 + $0x88] sm:$0xff]
    %v523 = vld [vmem:[#allocation9 + $0x90] sm:$0xff]
    %v524 = vld [vmem:[#allocation9 + $0x98] sm:$0xff]
    %v525 = vld [vmem:[#allocation9 + $0xa0] sm:$0xff]
    %v526 = vld [vmem:[#allocation9 + $0xa8] sm:$0xff]
    %v527 = vld [vmem:[#allocation9 + $0xb0] sm:$0xff]
    %v528 = vld [vmem:[#allocation9 + $0xb8] sm:$0xff]
    %v529 = vld [vmem:[#allocation9 + $0xc0] sm:$0xff]
    %v530 = vld [vmem:[#allocation9 + $0xc8] sm:$0xff]
    %v531 = vld [vmem:[#allocation9 + $0xd0] sm:$0xff]
    %v532 = vld [vmem:[#allocation9 + $0xd8] sm:$0xff]
    %v533 = vld [vmem:[#allocation9 + $0xe0] sm:$0xff]
    %v534 = vld [vmem:[#allocation9 + $0xe8] sm:$0xff]
    %v535 = vld [vmem:[#allocation9 + $0xf0] sm:$0xff]
    %v536 = vld [vmem:[#allocation9 + $0xf8] sm:$0xff]
    %v537 = vld [vmem:[#allocation9 + $0x100] sm:$0xff]
    %v538 = vld [vmem:[#allocation9 + $0x108] sm:$0xff]
    %v539 = vld [vmem:[#allocation9 + $0x110] sm:$0xff]
    %v540 = vld [vmem:[#allocation9 + $0x118] sm:$0xff]
    %v541 = vld [vmem:[#allocation9 + $0x120] sm:$0xff]
    %v542 = vld [vmem:[#allocation9 + $0x128] sm:$0xff]
    %v543 = vld [vmem:[#allocation9 + $0x130] sm:$0xff]
    %v544 = vld [vmem:[#allocation9 + $0x138] sm:$0xff]
    %v545 = vld [vmem:[#allocation9 + $0x140] sm:$0xff]
    %v546 = vld [vmem:[#allocation9 + $0x148] sm:$0xff]
    %v547 = vld [vmem:[#allocation9 + $0x150] sm:$0xff]
    %v548 = vld [vmem:[#allocation9 + $0x158] sm:$0xff]
    %v549 = vld [vmem:[#allocation9 + $0x160] sm:$0xff]
    %v550 = vld [vmem:[#allocation9 + $0x168] sm:$0xff]
    %v551 = vld [vmem:[#allocation9 + $0x170] sm:$0xff]
    %v552 = vld [vmem:[#allocation9 + $0x178] sm:$0xff]
    %v553 = vld [vmem:[#allocation9 + $0x180] sm:$0xff]
    %v554 = vld [vmem:[#allocation9 + $0x188] sm:$0xff]
    %v555 = vld [vmem:[#allocation9 + $0x190] sm:$0xff]
    %v556 = vld [vmem:[#allocation9 + $0x198] sm:$0xff]
    %v557 = vld [vmem:[#allocation9 + $0x1a0] sm:$0xff]
    %v558 = vld [vmem:[#allocation9 + $0x1a8] sm:$0xff]
    %v559 = vld [vmem:[#allocation9 + $0x1b0] sm:$0xff]
    %v560 = vld [vmem:[#allocation9 + $0x1b8] sm:$0xff]
    %v561 = vld [vmem:[#allocation9 + $0x1c0] sm:$0xff]
    %v562 = vld [vmem:[#allocation9 + $0x1c8] sm:$0xff]
    %v563 = vld [vmem:[#allocation9 + $0x1d0] sm:$0xff]
    %v564 = vld [vmem:[#allocation9 + $0x1d8] sm:$0xff]
    %v565 = vld [vmem:[#allocation9 + $0x1e0] sm:$0xff]
    %v566 = vld [vmem:[#allocation9 + $0x1e8] sm:$0xff]
    %v567 = vld [vmem:[#allocation9 + $0x1f0] sm:$0xff]
    %v568 = vld [vmem:[#allocation9 + $0x1f8] sm:$0xff]
    %v569 = vld [vmem:[%s96] sm:$0x3]
    %v571 = vlaneseq
    %v572 = vshrl.u32 %v571, 7
    %v573 = vsub.s32 0, %v572
    %v574 = vrot.slane %v569, %v573
    %v575 = vlaneseq
    %v576 = vshrl.u32 %v575, 7
    %v577 = vsub.s32 1, %v576
    %v578 = vrot.slane %v569, %v577
    %v585 = vunpack.c.l.b16 %v501
    %v586 = vunpack.c.h.b16 %v501
    %v587 = vunpack.c.l.b16 %v502
    %v588 = vunpack.c.h.b16 %v502
    %v589 = vunpack.c.l.b16 %v503
    %v590 = vunpack.c.h.b16 %v503
    %v591 = vunpack.c.l.b16 %v504
    %v592 = vunpack.c.h.b16 %v504
    %v593 = vpack.c.b16 %v589, %v585
    %v594 = vpack.c.b16 %v590, %v586
    %v595 = vpack.c.b16 %v591, %v587
    %v596 = vpack.c.b16 %v592, %v588
    %v665 = vunpack.c.l.b16 %v505
    %v666 = vunpack.c.h.b16 %v505
    %v667 = vunpack.c.l.b16 %v506
    %v668 = vunpack.c.h.b16 %v506
    %v669 = vunpack.c.l.b16 %v507
    %v670 = vunpack.c.h.b16 %v507
    %v671 = vunpack.c.l.b16 %v508
    %v672 = vunpack.c.h.b16 %v508
    %v673 = vunpack.c.l.b16 %v509
    %v674 = vunpack.c.h.b16 %v509
    %v675 = vunpack.c.l.b16 %v510
    %v676 = vunpack.c.h.b16 %v510
    %v677 = vunpack.c.l.b16 %v511
    %v678 = vunpack.c.h.b16 %v511
    %v679 = vunpack.c.l.b16 %v512
    %v680 = vunpack.c.h.b16 %v512
    %v681 = vunpack.c.l.b16 %v513
    %v682 = vunpack.c.h.b16 %v513
    %v683 = vunpack.c.l.b16 %v514
    %v684 = vunpack.c.h.b16 %v514
    %v685 = vunpack.c.l.b16 %v515
    %v686 = vunpack.c.h.b16 %v515
    %v687 = vunpack.c.l.b16 %v516
    %v688 = vunpack.c.h.b16 %v516
    %v689 = vunpack.c.l.b16 %v517
    %v690 = vunpack.c.h.b16 %v517
    %v691 = vunpack.c.l.b16 %v518
    %v692 = vunpack.c.h.b16 %v518
    %v693 = vunpack.c.l.b16 %v519
    %v694 = vunpack.c.h.b16 %v519
    %v695 = vunpack.c.l.b16 %v520
    %v696 = vunpack.c.h.b16 %v520
    %v697 = vunpack.c.l.b16 %v521
    %v698 = vunpack.c.h.b16 %v521
    %v699 = vunpack.c.l.b16 %v522
    %v700 = vunpack.c.h.b16 %v522
    %v701 = vunpack.c.l.b16 %v523
    %v702 = vunpack.c.h.b16 %v523
    %v703 = vunpack.c.l.b16 %v524
    %v704 = vunpack.c.h.b16 %v524
    %v705 = vunpack.c.l.b16 %v525
    %v706 = vunpack.c.h.b16 %v525
    %v707 = vunpack.c.l.b16 %v526
    %v708 = vunpack.c.h.b16 %v526
    %v709 = vunpack.c.l.b16 %v527
    %v710 = vunpack.c.h.b16 %v527
    %v711 = vunpack.c.l.b16 %v528
    %v712 = vunpack.c.h.b16 %v528
    %v713 = vunpack.c.l.b16 %v529
    %v714 = vunpack.c.h.b16 %v529
    %v715 = vunpack.c.l.b16 %v530
    %v716 = vunpack.c.h.b16 %v530
    %v717 = vunpack.c.l.b16 %v531
    %v718 = vunpack.c.h.b16 %v531
    %v719 = vunpack.c.l.b16 %v532
    %v720 = vunpack.c.h.b16 %v532
    %v721 = vunpack.c.l.b16 %v533
    %v722 = vunpack.c.h.b16 %v533
    %v723 = vunpack.c.l.b16 %v534
    %v724 = vunpack.c.h.b16 %v534
    %v725 = vunpack.c.l.b16 %v535
    %v726 = vunpack.c.h.b16 %v535
    %v727 = vunpack.c.l.b16 %v536
    %v728 = vunpack.c.h.b16 %v536
    %v729 = vunpack.c.l.b16 %v537
    %v730 = vunpack.c.h.b16 %v537
    %v731 = vunpack.c.l.b16 %v538
    %v732 = vunpack.c.h.b16 %v538
    %v733 = vunpack.c.l.b16 %v539
    %v734 = vunpack.c.h.b16 %v539
    %v735 = vunpack.c.l.b16 %v540
    %v736 = vunpack.c.h.b16 %v540
    %v737 = vunpack.c.l.b16 %v541
    %v738 = vunpack.c.h.b16 %v541
    %v739 = vunpack.c.l.b16 %v542
    %v740 = vunpack.c.h.b16 %v542
    %v741 = vunpack.c.l.b16 %v543
    %v742 = vunpack.c.h.b16 %v543
    %v743 = vunpack.c.l.b16 %v544
    %v744 = vunpack.c.h.b16 %v544
    %v745 = vunpack.c.l.b16 %v545
    %v746 = vunpack.c.h.b16 %v545
    %v747 = vunpack.c.l.b16 %v546
    %v748 = vunpack.c.h.b16 %v546
    %v749 = vunpack.c.l.b16 %v547
    %v750 = vunpack.c.h.b16 %v547
    %v751 = vunpack.c.l.b16 %v548
    %v752 = vunpack.c.h.b16 %v548
    %v753 = vunpack.c.l.b16 %v549
    %v754 = vunpack.c.h.b16 %v549
    %v755 = vunpack.c.l.b16 %v550
    %v756 = vunpack.c.h.b16 %v550
    %v757 = vunpack.c.l.b16 %v551
    %v758 = vunpack.c.h.b16 %v551
    %v759 = vunpack.c.l.b16 %v552
    %v760 = vunpack.c.h.b16 %v552
    %v761 = vunpack.c.l.b16 %v553
    %v762 = vunpack.c.h.b16 %v553
    %v763 = vunpack.c.l.b16 %v554
    %v764 = vunpack.c.h.b16 %v554
    %v765 = vunpack.c.l.b16 %v555
    %v766 = vunpack.c.h.b16 %v555
    %v767 = vunpack.c.l.b16 %v556
    %v768 = vunpack.c.h.b16 %v556
    %v769 = vunpack.c.l.b16 %v557
    %v770 = vunpack.c.h.b16 %v557
    %v771 = vunpack.c.l.b16 %v558
    %v772 = vunpack.c.h.b16 %v558
    %v773 = vunpack.c.l.b16 %v559
    %v774 = vunpack.c.h.b16 %v559
    %v775 = vunpack.c.l.b16 %v560
    %v776 = vunpack.c.h.b16 %v560
    %v777 = vunpack.c.l.b16 %v561
    %v778 = vunpack.c.h.b16 %v561
    %v779 = vunpack.c.l.b16 %v562
    %v780 = vunpack.c.h.b16 %v562
    %v781 = vunpack.c.l.b16 %v563
    %v782 = vunpack.c.h.b16 %v563
    %v783 = vunpack.c.l.b16 %v564
    %v784 = vunpack.c.h.b16 %v564
    %v785 = vunpack.c.l.b16 %v565
    %v786 = vunpack.c.h.b16 %v565
    %v787 = vunpack.c.l.b16 %v566
    %v788 = vunpack.c.h.b16 %v566
    %v789 = vunpack.c.l.b16 %v567
    %v790 = vunpack.c.h.b16 %v567
    %v791 = vunpack.c.l.b16 %v568
    %v792 = vunpack.c.h.b16 %v568
    %v793 = vpack.c.b16 %v667, %v665
    %v794 = vpack.c.b16 %v668, %v666
    %v795 = vpack.c.b16 %v671, %v669
    %v796 = vpack.c.b16 %v672, %v670
    %v797 = vpack.c.b16 %v675, %v673
    %v798 = vpack.c.b16 %v676, %v674
    %v799 = vpack.c.b16 %v679, %v677
    %v800 = vpack.c.b16 %v680, %v678
    %v801 = vpack.c.b16 %v683, %v681
    %v802 = vpack.c.b16 %v684, %v682
    %v803 = vpack.c.b16 %v687, %v685
    %v804 = vpack.c.b16 %v688, %v686
    %v805 = vpack.c.b16 %v691, %v689
    %v806 = vpack.c.b16 %v692, %v690
    %v807 = vpack.c.b16 %v695, %v693
    %v808 = vpack.c.b16 %v696, %v694
    %v809 = vpack.c.b16 %v699, %v697
    %v810 = vpack.c.b16 %v700, %v698
    %v811 = vpack.c.b16 %v703, %v701
    %v812 = vpack.c.b16 %v704, %v702
    %v813 = vpack.c.b16 %v707, %v705
    %v814 = vpack.c.b16 %v708, %v706
    %v815 = vpack.c.b16 %v711, %v709
    %v816 = vpack.c.b16 %v712, %v710
    %v817 = vpack.c.b16 %v715, %v713
    %v818 = vpack.c.b16 %v716, %v714
    %v819 = vpack.c.b16 %v719, %v717
    %v820 = vpack.c.b16 %v720, %v718
    %v821 = vpack.c.b16 %v723, %v721
    %v822 = vpack.c.b16 %v724, %v722
    %v823 = vpack.c.b16 %v727, %v725
    %v824 = vpack.c.b16 %v728, %v726
    %v825 = vpack.c.b16 %v731, %v729
    %v826 = vpack.c.b16 %v732, %v730
    %v827 = vpack.c.b16 %v735, %v733
    %v828 = vpack.c.b16 %v736, %v734
    %v829 = vpack.c.b16 %v739, %v737
    %v830 = vpack.c.b16 %v740, %v738
    %v831 = vpack.c.b16 %v743, %v741
    %v832 = vpack.c.b16 %v744, %v742
    %v833 = vpack.c.b16 %v747, %v745
    %v834 = vpack.c.b16 %v748, %v746
    %v835 = vpack.c.b16 %v751, %v749
    %v836 = vpack.c.b16 %v752, %v750
    %v837 = vpack.c.b16 %v755, %v753
    %v838 = vpack.c.b16 %v756, %v754
    %v839 = vpack.c.b16 %v759, %v757
    %v840 = vpack.c.b16 %v760, %v758
    %v841 = vpack.c.b16 %v763, %v761
    %v842 = vpack.c.b16 %v764, %v762
    %v843 = vpack.c.b16 %v767, %v765
    %v844 = vpack.c.b16 %v768, %v766
    %v845 = vpack.c.b16 %v771, %v769
    %v846 = vpack.c.b16 %v772, %v770
    %v847 = vpack.c.b16 %v775, %v773
    %v848 = vpack.c.b16 %v776, %v774
    %v849 = vpack.c.b16 %v779, %v777
    %v850 = vpack.c.b16 %v780, %v778
    %v851 = vpack.c.b16 %v783, %v781
    %v852 = vpack.c.b16 %v784, %v782
    %v853 = vpack.c.b16 %v787, %v785
    %v854 = vpack.c.b16 %v788, %v786
    %v855 = vpack.c.b16 %v791, %v789
    %v856 = vpack.c.b16 %v792, %v790
    %921 = vmatprep.subr.bf16.mxu0 %v808
    %922 = vmatpush1.bf16.msra.mxu0 %v807
    %923 = vmatprep.subr.bf16.mxu0 %v806
    %924 = vmatpush1.bf16.msra.mxu0 %v805
    %925 = vmatprep.subr.bf16.mxu0 %v804
    %926 = vmatpush1.bf16.msra.mxu0 %v803
    %927 = vmatprep.subr.bf16.mxu0 %v802
    %928 = vmatpush1.bf16.msra.mxu0 %v801
    %929 = vmatprep.subr.bf16.mxu0 %v800
    %930 = vmatpush1.bf16.msra.mxu0 %v799
    %931 = vmatprep.subr.bf16.mxu0 %v798
    %932 = vmatpush1.bf16.msra.mxu0 %v797
    %933 = vmatprep.subr.bf16.mxu0 %v796
    %934 = vmatpush1.bf16.msra.mxu0 %v795
    %935 = vmatprep.subr.bf16.mxu0 %v794
    %936 = vmatpush1.bf16.msra.mxu0 %v793
    %937 = vmatprep.subr.bf16.mxu0 %v824
    %938 = vmatpush2.bf16.msra.mxu0 %v823
    %939 = vmatprep.subr.bf16.mxu0 %v822
    %940 = vmatpush2.bf16.msra.mxu0 %v821
    %941 = vmatprep.subr.bf16.mxu0 %v820
    %942 = vmatpush2.bf16.msra.mxu0 %v819
    %943 = vmatprep.subr.bf16.mxu0 %v818
    %944 = vmatpush2.bf16.msra.mxu0 %v817
    %945 = vmatprep.subr.bf16.mxu0 %v816
    %946 = vmatpush2.bf16.msra.mxu0 %v815
    %947 = vmatprep.subr.bf16.mxu0 %v814
    %948 = vmatpush2.bf16.msra.mxu0 %v813
    %949 = vmatprep.subr.bf16.mxu0 %v812
    %950 = vmatpush2.bf16.msra.mxu0 %v811
    %951 = vmatprep.subr.bf16.mxu0 %v810
    %952 = vmatpush2.bf16.msra.mxu0 %v809
    %953 = vmatprep.mubr.bf16.mxu0 %v594
    %954 = vmatmul.mubr.bf16.gmra.mxu0 %v593
    %v955 = vpop.f32.mrf.mxu0
    %v956 = vadd.f32 %v574, %v955
    %v957 = vpop.f32.mrf.mxu0
    %v958 = vadd.f32 %v578, %v957
    %v959 = vpop.f32.mrf.mxu0
    %v960 = vadd.f32 %v574, %v959
    %v961 = vpop.f32.mrf.mxu0
    %v962 = vadd.f32 %v578, %v961
    %963 = vdwg.mxu0
    %964 = vmatprep.subr.bf16.mxu0 %v840
    %965 = vmatpush1.bf16.msra.mxu0 %v839
    %966 = vmatprep.subr.bf16.mxu0 %v838
    %967 = vmatpush1.bf16.msra.mxu0 %v837
    %968 = vmatprep.subr.bf16.mxu0 %v836
    %969 = vmatpush1.bf16.msra.mxu0 %v835
    %970 = vmatprep.subr.bf16.mxu0 %v834
    %971 = vmatpush1.bf16.msra.mxu0 %v833
    %972 = vmatprep.subr.bf16.mxu0 %v832
    %973 = vmatpush1.bf16.msra.mxu0 %v831
    %974 = vmatprep.subr.bf16.mxu0 %v830
    %975 = vmatpush1.bf16.msra.mxu0 %v829
    %976 = vmatprep.subr.bf16.mxu0 %v828
    %977 = vmatpush1.bf16.msra.mxu0 %v827
    %978 = vmatprep.subr.bf16.mxu0 %v826
    %979 = vmatpush1.bf16.msra.mxu0 %v825
    %980 = vmatprep.subr.bf16.mxu0 %v856
    %981 = vmatpush2.bf16.msra.mxu0 %v855
    %982 = vmatprep.subr.bf16.mxu0 %v854
    %983 = vmatpush2.bf16.msra.mxu0 %v853
    %984 = vmatprep.subr.bf16.mxu0 %v852
    %985 = vmatpush2.bf16.msra.mxu0 %v851
    %986 = vmatprep.subr.bf16.mxu0 %v850
    %987 = vmatpush2.bf16.msra.mxu0 %v849
    %988 = vmatprep.subr.bf16.mxu0 %v848
    %989 = vmatpush2.bf16.msra.mxu0 %v847
    %990 = vmatprep.subr.bf16.mxu0 %v846
    %991 = vmatpush2.bf16.msra.mxu0 %v845
    %992 = vmatprep.subr.bf16.mxu0 %v844
    %993 = vmatpush2.bf16.msra.mxu0 %v843
    %994 = vmatprep.subr.bf16.mxu0 %v842
    %995 = vmatpush2.bf16.msra.mxu0 %v841
    %996 = vmatprep.mubr.bf16.mxu0 %v596
    %997 = vmatmul.mubr.bf16.gmra.mxu0 %v595
    %v998 = vpop.f32.mrf.mxu0
    %v999 = vadd.f32 %v956, %v998
    %v1000 = vpop.f32.mrf.mxu0
    %v1001 = vadd.f32 %v958, %v1000
    %v1002 = vpop.f32.mrf.mxu0
    %v1003 = vadd.f32 %v960, %v1002
    %v1004 = vpop.f32.mrf.mxu0
    %v1005 = vadd.f32 %v962, %v1004
    %1006 = vdwg.mxu0
    %1007 = vst [vmem:[#allocation11] sm:$0xff] %v999
    %1008 = vst [vmem:[#allocation11 + $0x8] sm:$0xff] %v1001
    %1009 = vst [vmem:[#allocation11 + $0x10] sm:$0xff] %v1003
    %1010 = vst [vmem:[#allocation11 + $0x18] sm:$0xff] %v1005
    // Predicated region
    $region42: #{tpu_custom_call.1} parent=1 // pred_check
      _
    $region43: #{tpu_custom_call.1} parent=1 // pred_check_branch
      %1012 = sbr.rel (0) target = $region45
    $region44: #{tpu_custom_call.1} parent=1 // pred_region
      %s1013 = sadd.s32 0, 0
      %s1014 = smul.u32 2, %s1013
      %s1016 = ssub.s32 512, 512
      %1017 = vsyncadd [#allocation5], %s1016
      %s1018 = smul.addr %s1014, 128
      %s1019 = scalar_lea.hbm %s5, %s1018
      %s1020 = sshll.u32 [#allocation11], 4
      %s1021 = int_to_ptr.vmem [resolvable:$true] %s1020
      %1026 = dma.vmem_to_hbm [thread:$0]  %s1021, 512, %s1019, [#allocation5], 256, 256, 16
    $region45: #{tpu_custom_call.1} parent=1 // pred_fallthru
      _
    // Predicated region
    $region46: #{tpu_custom_call.1} parent=1 // pred_check
      _
    $region47: #{tpu_custom_call.1} parent=1 // pred_check_branch
      %1028 = sbr.rel (0) target = $region49
    $region48: #{tpu_custom_call.1} parent=1 // pred_region
      %1029 = dma.done [#allocation5], 512
    $region49: #{tpu_custom_call.1} parent=1 // pred_fallthru
      _
    %1030 = vsyncpa [#allocation4], 1
    %1031 = vsyncpa [#allocation7], 1
    %1032 = vsyncpa [#allocation10], 1
    %1033 = vsyncpa [#allocation5], 1

</llo_original>
